<compile_context>
chip_gen: v7x
topology: tpu7x:2x2x1
jax: 0.10.0
libtpu: 0.0.40
codegen_flags: <defaults>
</compile_context>

<pallas_src>
import functools

import jax
import jax.numpy as jnp
from jax.experimental import pallas as pl
from jax.experimental.pallas import tpu as pltpu


_LANES = 512            # lane-dense last dim of the streaming layout (multiple of 128)
_PARTS = 2              # leading "parallel" grid axis (sharded across TCs where available)
_SMALL_LIMIT = 2 << 20  # per-input VMEM-resident cutoff for the gridless path


def _cdiv(a, b):
    return -(-a // b)


def _round_up(a, b):
    return _cdiv(a, b) * b


def _row_quantum(dtype):
    # Sublane quantum by element width (f32: 8, bf16/f16: 16, int8/fp8: 32).
    return {4: 8, 2: 16, 1: 32}.get(jnp.dtype(dtype).itemsize, 8)


def _tile_budget_bytes():
    # Largest per-input tile that keeps 2 inputs x 2 pipeline buffers well
    # under the per-core VMEM capacity (64 MiB on v7x, 128 MiB on v5e/v6e).
    try:
        cap = int(pltpu.get_tpu_info().vmem_capacity_bytes)
    except Exception:
        cap = 64 << 20  # conservative fallback: v7x per-TensorCore VMEM
    return max(1 << 20, min(8 << 20, cap // 8))


def _plan(n, itemsize, rq, tile_budget):
    """Pick (rows_total, tile_rows, k) so the grid exactly tiles the padded data."""
    rows_min = _cdiv(n, _LANES)
    rows_per_part = _round_up(_cdiv(rows_min, _PARTS), rq)
    tile_rows_max = max(rq, (tile_budget // (_LANES * itemsize)) // rq * rq)
    k = max(1, _cdiv(rows_per_part, tile_rows_max))
    tile_rows = _round_up(_cdiv(rows_per_part, k), rq)
    rows_total = _PARTS * k * tile_rows
    return rows_total, tile_rows, k


def _mse_single_block_kernel(inv_n, out_ref, tgt_ref, loss_ref):
    # Whole arrays resident in VMEM; upcast before subtracting.
    d = out_ref[...].astype(jnp.float32) - tgt_ref[...].astype(jnp.float32)
    loss_ref[0, 0] = jnp.sum(d * d) * jnp.float32(inv_n)


def _mse_tiled_kernel(out_ref, tgt_ref, acc_ref):
    # grid = (parts, k); axis 0 "parallel", axis 1 is the streaming reduction.
    i = pl.program_id(1)

    @pl.when(i == 0)
    def _init():
        acc_ref[...] = jnp.zeros_like(acc_ref)

    d = out_ref[...].astype(jnp.float32) - tgt_ref[...].astype(jnp.float32)
    sq = d * d
    tr, c = sq.shape
    # Fold the tile into the (8, LANES) accumulator by summing only over a
    # major (non-minor) axis: cheap vreg adds, no per-step cross-lane reduce.
    acc_ref[...] += sq.reshape(tr // 8, 8, c).sum(axis=0)


def custom_loss(output, target):
    """mean((output - target)**2), computed in Pallas TPU kernels."""
    assert output.shape == target.shape, (output.shape, target.shape)
    assert output.dtype == target.dtype, (output.dtype, target.dtype)
    n = 1
    for s in output.shape:
        n *= int(s)
    assert n > 0
    inv_n = 1.0 / float(n)
    itemsize = jnp.dtype(output.dtype).itemsize

    if output.ndim == 2:
        r, c = output.shape
        # Account for sublane/lane padding of the VMEM-resident layout.
        resident_bytes = _round_up(r, 8) * _round_up(c, 128) * itemsize
        if resident_bytes <= _SMALL_LIMIT:
            loss = pl.pallas_call(
                functools.partial(_mse_single_block_kernel, inv_n),
                out_shape=jax.ShapeDtypeStruct((1, 1), jnp.float32),
                in_specs=[
                    pl.BlockSpec(memory_space=pltpu.MemorySpace.VMEM),
                    pl.BlockSpec(memory_space=pltpu.MemorySpace.VMEM),
                ],
                out_specs=pl.BlockSpec(memory_space=pltpu.MemorySpace.SMEM),
            )(output, target)
            return loss[0, 0]

    # Streaming path: flatten row-major, zero-pad, reshape lane-dense.
    rq = _row_quantum(output.dtype)
    tile_budget = _tile_budget_bytes()
    rows_total, tile_rows, k = _plan(n, itemsize, rq, tile_budget)
    padded_n = rows_total * _LANES

    o = output.reshape(-1)
    t = target.reshape(-1)
    if padded_n != n:
        # Zero padding contributes exactly 0 to the sum of squared differences.
        o = jnp.pad(o, (0, padded_n - n))
        t = jnp.pad(t, (0, padded_n - n))
    o = o.reshape(rows_total, _LANES)
    t = t.reshape(rows_total, _LANES)

    tile_bytes = tile_rows * _LANES * itemsize
    # 2 inputs x 2 pipeline buffers + output blocks + headroom.
    vmem_limit = int(4 * tile_bytes + (4 << 20))

    partials = pl.pallas_call(
        _mse_tiled_kernel,
        out_shape=jax.ShapeDtypeStruct((_PARTS, 8, _LANES), jnp.float32),
        grid=(_PARTS, k),
        in_specs=[
            pl.BlockSpec((tile_rows, _LANES), lambda p, i, _k=k: (p * _k + i, 0)),
            pl.BlockSpec((tile_rows, _LANES), lambda p, i, _k=k: (p * _k + i, 0)),
        ],
        # Per-partition accumulator lives in the output block (resident across
        # the "arbitrary" axis); kernel sees an (8, LANES) ref.
        out_specs=pl.BlockSpec((None, 8, _LANES), lambda p, i: (p, 0, 0)),
        compiler_params=pltpu.CompilerParams(
            dimension_semantics=("parallel", "arbitrary"),
            vmem_limit_bytes=vmem_limit,
        ),
    )(o, t)

    # Single cross-lane reduce + 1/n scale on a tiny (PARTS, 8, LANES) array.
    return jnp.sum(partials) * jnp.float32(inv_n)


if __name__ == "__main__":
    key = jax.random.PRNGKey(0)
    k1, k2, k3, k4, k5, k6 = jax.random.split(key, 6)

    # Same shapes as the PyTorch snippet: torch.randn(10, 10) -> gridless path.
    output = jax.random.normal(k1, (10, 10), dtype=jnp.float32)
    target = jax.random.normal(k2, (10, 10), dtype=jnp.float32)
    loss = custom_loss(output, target)
    jax.block_until_ready(loss)
    ref = jnp.mean((output - target) ** 2)
    assert jnp.allclose(loss, ref, rtol=1e-6, atol=1e-6), (loss, ref)

    # Larger input to exercise the tiled streaming-reduction path (exact fit).
    big_o = jax.random.normal(k3, (1024, 640), dtype=jnp.float32)
    big_t = jax.random.normal(k4, (1024, 640), dtype=jnp.float32)
    loss_big = custom_loss(big_o, big_t)
    jax.block_until_ready(loss_big)
    ref_big = jnp.mean((big_o - big_t) ** 2)
    assert jnp.allclose(loss_big, ref_big, rtol=1e-4, atol=1e-6), (loss_big, ref_big)

    # Odd shape to exercise the flatten + zero-pad path.
    odd_o = jax.random.normal(k5, (1000, 999), dtype=jnp.float32)
    odd_t = jax.random.normal(k6, (1000, 999), dtype=jnp.float32)
    loss_odd = custom_loss(odd_o, odd_t)
    jax.block_until_ready(loss_odd)
    ref_odd = jnp.mean((odd_o - odd_t) ** 2)
    assert jnp.allclose(loss_odd, ref_odd, rtol=1e-4, atol=1e-6), (loss_odd, ref_odd)

    print("KERNEL_OK")
</pallas_src>

<mosaic_0001>
module attributes {stable_mosaic.version = 11 : i64} {
  func.func @_mse_single_block_kernel(%arg0: memref<10x10xf32, #tpu.memory_space<vmem>>, %arg1: memref<10x10xf32, #tpu.memory_space<vmem>>, %arg2: memref<1x1xf32, #tpu.memory_space<smem>>) attributes {dimension_semantics = [], scalar_prefetch = 0 : i64, scratch_operands = 0 : i64, tpu.core_type = #tpu.core_type<tc>} {
    %c0 = arith.constant 0 : index
    %c0_0 = arith.constant 0 : index
    %0 = vector.load %arg0[%c0, %c0_0] : memref<10x10xf32, #tpu.memory_space<vmem>>, vector<10x10xf32>
    %c0_1 = arith.constant 0 : index
    %c0_2 = arith.constant 0 : index
    %1 = vector.load %arg1[%c0_1, %c0_2] : memref<10x10xf32, #tpu.memory_space<vmem>>, vector<10x10xf32>
    %2 = arith.subf %0, %1 : vector<10x10xf32>
    %3 = arith.mulf %2, %2 : vector<10x10xf32>
    %4 = vector.shape_cast %3 : vector<10x10xf32> to vector<1x10x10xf32>
    %cst = arith.constant dense<0.000000e+00> : vector<1xf32>
    %5 = vector.multi_reduction <add>, %4, %cst [1, 2] : vector<1x10x10xf32> to vector<1xf32>
    %6 = vector.shape_cast %5 : vector<1xf32> to vector<1x1x1xf32>
    %7 = vector.extract %6[0, 0, 0] : f32 from vector<1x1x1xf32>
    %cst_3 = arith.constant 0.00999999977 : f32
    %8 = arith.mulf %7, %cst_3 : f32
    %c0_4 = arith.constant 0 : index
    %c0_5 = arith.constant 0 : index
    %9 = memref.load %arg2[%c0_4, %c0_5] : memref<1x1xf32, #tpu.memory_space<smem>>
    memref.store %8, %arg2[%c0_4, %c0_5] : memref<1x1xf32, #tpu.memory_space<smem>>
    return
  }
}

</mosaic_0001>

<llo_original>
// kernel: tpu_custom_call.1
$region0: #{tpu_custom_call.1}
  #allocation0 [shape = 'u32[]', space=smem, size = 0x4, offset = 0x4, fixed_abs, tag = 'smem constant byte address 0x4 - core index']
  #allocation1 [shape = 'u32[144,128]{1,0:T(1,128)}', space=vmem, size = 0x12000, scoped, tag = 'internal scratch']
  %s0 = inlined_call_operand.hbm [shape: f32[10,10], index: 0, kind: input, shape index: {}]
  %s1 = inlined_call_operand.hbm [shape: f32[10,10], index: 1, kind: input, shape index: {}]
  %s2 = inlined_call_operand.hbm [shape: f32[1,1], index: 2, kind: output, shape index: {}]
  %s3 = sld [smem:[#allocation0]]
  $region26: #{tpu_custom_call.1} parent=0
    _
  %s5 = ssub.s32 1, %s3
  %s6 = scalar_select 0, %s5, %s3
  $region1: #{tpu_custom_call.1} parent=0
    #allocation2 [shape = 'u8[8192]{0}', space=vmem, size = 0x2000, scoped, tag = 'input window, operand 0, single buffered']
    #allocation3 [shape = 's32[1]{0}', space=sflag, size = 0x4, scoped, tag = 'scoped memory for tpu_custom_call.1']
    #allocation4 [shape = 's32[1]{0}', space=sflag, size = 0x4, scoped, tag = 'scoped memory for tpu_custom_call.1']
    #allocation5 [shape = 'u8[8192]{0}', space=vmem, size = 0x2000, scoped, tag = 'input window, operand 1, single buffered']
    #allocation6 [shape = 's32[1]{0}', space=sflag, size = 0x4, scoped, tag = 'scoped memory for tpu_custom_call.1']
    #allocation7 [shape = 'u8[512]{0}', space=smem, size = 0x200, scoped, tag = 'output window, operand 0, single buffered']
    %7 = vsyncpa [#allocation3], 0
    %8 = vsyncpa [#allocation6], 0
    %9 = vsyncpa [#allocation4], 0
    // Predicated region
    $region2: #{tpu_custom_call.1} parent=1 // pred_check
      _
    $region3: #{tpu_custom_call.1} parent=1 // pred_check_branch
      %11 = sbr.rel (0) target = $region5
    $region4: #{tpu_custom_call.1} parent=1 // pred_region
      %s13 = ssub.s32 256, 256
      %14 = vsyncadd [#allocation3], %s13
      %s15 = sshll.u32 [#allocation2], 4
      %s16 = int_to_ptr.vmem [resolvable:$true] %s15
      %21 = dma.hbm_to_vmem [thread:$0]  %s0, 256, %s16, [#allocation3], 128, 128, 8
    $region5: #{tpu_custom_call.1} parent=1 // pred_fallthru
      _
    // Predicated region
    $region6: #{tpu_custom_call.1} parent=1 // pred_check
      _
    $region7: #{tpu_custom_call.1} parent=1 // pred_check_branch
      %23 = sbr.rel (0) target = $region9
    $region8: #{tpu_custom_call.1} parent=1 // pred_region
      %s25 = ssub.s32 256, 256
      %26 = vsyncadd [#allocation6], %s25
      %s27 = sshll.u32 [#allocation5], 4
      %s28 = int_to_ptr.vmem [resolvable:$true] %s27
      %33 = dma.hbm_to_vmem [thread:$0]  %s1, 256, %s28, [#allocation6], 128, 128, 8
    $region9: #{tpu_custom_call.1} parent=1 // pred_fallthru
      _
    // Predicated region
    $region10: #{tpu_custom_call.1} parent=1 // pred_check
      _
    $region11: #{tpu_custom_call.1} parent=1 // pred_check_branch
      %35 = sbr.rel (0) target = $region13
    $region12: #{tpu_custom_call.1} parent=1 // pred_region
      %36 = dma.done [#allocation3], 256
    $region13: #{tpu_custom_call.1} parent=1 // pred_fallthru
      _
    // Predicated region
    $region14: #{tpu_custom_call.1} parent=1 // pred_check
      _
    $region15: #{tpu_custom_call.1} parent=1 // pred_check_branch
      %38 = sbr.rel (0) target = $region17
    $region16: #{tpu_custom_call.1} parent=1 // pred_region
      %39 = dma.done [#allocation6], 256
    $region17: #{tpu_custom_call.1} parent=1 // pred_fallthru
      _
    %v40 = vld [vmem:[#allocation2] sm:$0xff]
    %v41 = vld [vmem:[#allocation2 + $0x8] sm:$0x3]
    %v42 = vld [vmem:[#allocation5] sm:$0xff]
    %v43 = vld [vmem:[#allocation5 + $0x8] sm:$0x3]
    %v44 = vsub.f32 %v40, %v42
    %v45 = vsub.f32 %v41, %v43
    %v46 = vmul.f32 %v44, %v44
    %v47 = vmul.f32 %v45, %v45
    %vm48 = vcmask 80896
    %v49 = vsel %vm48, %v46, 0.0
    %vm50 = vcmask 74752
    %v51 = vsel %vm50, %v47, 0.0
    %v52 = vadd.f32 %v49, %v51
    %53 = vadd.xlane.f32.xlu0 %v52
    %v54 = vpop.xlane.xlu0 %53
    %v55 = vrot.slane %v54, 4
    %v56 = vadd.f32 %v54, %v55
    %v57 = vrot.slane %v56, 2
    %v58 = vadd.f32 %v56, %v57
    %v59 = vrot.slane %v58, 1
    %v60 = vadd.f32 %v58, %v59
    %s61 = vtos %v60
    %s62 = smul.f32 %s61, 0.01
    %s63 = scalar_lea.smem [#allocation7], 0
    %64 = sst [smem:[%s63]] %s62
    // Predicated region
    $region18: #{tpu_custom_call.1} parent=1 // pred_check
      _
    $region19: #{tpu_custom_call.1} parent=1 // pred_check_branch
      %66 = sbr.rel (0) target = $region21
    $region20: #{tpu_custom_call.1} parent=1 // pred_region
      %s68 = ssub.s32 16, 16
      %69 = vsyncadd [#allocation4], %s68
      %72 = dma.smem_to_hbm [#allocation7], 16, %s2, [#allocation4]
    $region21: #{tpu_custom_call.1} parent=1 // pred_fallthru
      _
    // Predicated region
    $region22: #{tpu_custom_call.1} parent=1 // pred_check
      _
    $region23: #{tpu_custom_call.1} parent=1 // pred_check_branch
      %74 = sbr.rel (0) target = $region25
    $region24: #{tpu_custom_call.1} parent=1 // pred_region
      %75 = dma.done [#allocation4], 16
    $region25: #{tpu_custom_call.1} parent=1 // pred_fallthru
      _
    %76 = sfence
    %77 = vsyncpa [#allocation3], 1
    %78 = vsyncpa [#allocation6], 1
    %79 = vsyncpa [#allocation4], 1

</llo_original>
